<compile_context>
chip_gen: v7x
topology: tpu7x:2x2x1
jax: 0.10.0
libtpu: 0.0.40
codegen_flags: <defaults>
</compile_context>

<pallas_src>
import functools

import jax
import jax.numpy as jnp
from jax.experimental import pallas as pl
from jax.experimental.pallas import tpu as pltpu

BN_EPS = 1e-5
LRELU_SLOPE = 0.1
LANE = 128


def ladder_encoder_kernel(x_ref, w1_ref, gamma_ref, beta_ref, w2_ref, b2_ref,
                          h_out_ref, z_out_ref):
    # MXU operand dtype is driven by the (pre-cast) weights; accumulation is f32.
    mm_dtype = w1_ref.dtype

    # ---- linear 1: [N, X] @ [X, Hp]  (bias omitted: cancels under train-mode BN) ----
    x = x_ref[...].astype(mm_dtype)
    h = jnp.dot(x, w1_ref[...], preferred_element_type=jnp.float32)

    # ---- BatchNorm1d (training mode, biased variance), two-pass for fidelity ----
    n = h.shape[0]
    inv_n = 1.0 / n
    mean = jnp.sum(h, axis=0, keepdims=True) * inv_n          # [1, Hp]
    centered = h - mean                                        # [N, Hp]
    var = jnp.sum(centered * centered, axis=0, keepdims=True) * inv_n
    scale = gamma_ref[...] * jax.lax.rsqrt(var + BN_EPS)       # EUP rsqrt, [1, Hp]
    h_bn = centered * scale + beta_ref[...]                    # 2 VPU ops / element

    # ---- LeakyReLU(0.1): max(x, 0.1 * x) (identical for slope in (0,1)) ----
    h_act = jnp.maximum(h_bn, LRELU_SLOPE * h_bn)
    h_out_ref[...] = h_act

    # ---- linear 2 (latent_sample): [N, Hp] @ [Hp, Zp] + b2 ----
    z_out_ref[...] = (jnp.dot(h_act.astype(mm_dtype), w2_ref[...],
                              preferred_element_type=jnp.float32)
                      + b2_ref[...])


def _round_up(v, m):
    return ((v + m - 1) // m) * m


def prepare_params(w1, b1, gamma, beta, w2, b2, *, matmul_dtype=jnp.float32):
    """One-time parameter preparation (outside the jitted forward).

    Pads only the lane/output feature dims (h_dim, z_dim) to multiples of 128 so the
    kernel's activations/outputs are lane-dense; zero padding keeps padded lanes at
    exact zero.  b1 is accepted for API parity with nn.Linear but dropped: under
    train-mode BatchNorm1d it cancels exactly (mean shift / variance invariance).
    Weights may be pre-cast to bf16 for native MXU rate (f32 accumulation kept).
    """
    del b1
    h_dim = w1.shape[1]
    z_dim = w2.shape[1]
    hp = _round_up(h_dim, LANE)
    zp = _round_up(z_dim, LANE)

    w1_p = jnp.pad(w1, ((0, 0), (0, hp - h_dim))).astype(matmul_dtype)
    gamma_p = jnp.pad(gamma, ((0, 0), (0, hp - h_dim))).astype(jnp.float32)
    beta_p = jnp.pad(beta, ((0, 0), (0, hp - h_dim))).astype(jnp.float32)
    w2_p = jnp.pad(w2, ((0, hp - h_dim), (0, zp - z_dim))).astype(matmul_dtype)
    b2_p = jnp.pad(b2, ((0, 0), (0, zp - z_dim))).astype(jnp.float32)
    return w1_p, gamma_p, beta_p, w2_p, b2_p


@functools.partial(jax.jit, static_argnames=("h_dim", "z_dim"))
def ladder_encoder_fwd(x, w1_p, gamma_p, beta_p, w2_p, b2_p, *, h_dim, z_dim):
    """x: [N, x_dim] (unpadded); padded params from `prepare_params`.

    Returns (h_act [N, h_dim], z [N, z_dim]) exactly as the PyTorch forward.
    """
    n, x_dim = x.shape
    hp = w1_p.shape[1]
    zp = w2_p.shape[1]

    full = lambda shape: pl.BlockSpec(shape, lambda: (0,) * len(shape))

    itemsize = lambda a: jnp.dtype(a.dtype).itemsize
    cost = pl.CostEstimate(
        flops=2 * n * (x_dim * hp + hp * zp) + 10 * n * hp,
        transcendentals=hp,                                   # rsqrt
        bytes_accessed=(x.size * itemsize(x)
                        + w1_p.size * itemsize(w1_p)
                        + w2_p.size * itemsize(w2_p)
                        + (gamma_p.size + beta_p.size + b2_p.size) * 4
                        + (n * hp + n * zp) * 4),
    )

    h_pad, z_pad = pl.pallas_call(
        ladder_encoder_kernel,
        grid=(),
        in_specs=[
            full((n, x_dim)),        # x: block == full array, no (8,128) constraint
            full((x_dim, hp)),       # w1
            full((1, hp)),           # gamma
            full((1, hp)),           # beta
            full((hp, zp)),          # w2
            full((1, zp)),           # b2
        ],
        out_specs=[
            full((n, hp)),
            full((n, zp)),
        ],
        out_shape=[
            jax.ShapeDtypeStruct((n, hp), jnp.float32),
            jax.ShapeDtypeStruct((n, zp), jnp.float32),
        ],
        compiler_params=pltpu.CompilerParams(vmem_limit_bytes=64 << 20),
        cost_estimate=cost,
    )(x, w1_p, gamma_p, beta_p, w2_p, b2_p)

    return h_pad[:, :h_dim], z_pad[:, :z_dim]


def _reference(x, w1, b1, gamma, beta, w2, b2):
    # Full PyTorch semantics, including b1 (which must cancel under train-mode BN).
    h = x @ w1 + b1
    mean = jnp.mean(h, axis=0, keepdims=True)
    var = jnp.mean((h - mean) ** 2, axis=0, keepdims=True)
    h_bn = (h - mean) / jnp.sqrt(var + BN_EPS) * gamma + beta
    h_act = jnp.where(h_bn >= 0, h_bn, LRELU_SLOPE * h_bn)
    return h_act, h_act @ w2 + b2


if __name__ == "__main__":
    # dims = [x_dim, h_dim, z_dim]
    N, X_DIM, H_DIM, Z_DIM = 8, 32, 64, 16

    key = jax.random.PRNGKey(0)
    kx, kw1, kb1, kw2, kb2 = jax.random.split(key, 5)

    x = jax.random.normal(kx, (N, X_DIM), dtype=jnp.float32)

    # Deterministic param init (PyTorch-style uniform bounds), stored transposed [in, out].
    bound1 = 1.0 / (X_DIM ** 0.5)
    w1 = jax.random.uniform(kw1, (X_DIM, H_DIM), jnp.float32, -bound1, bound1)
    b1 = jax.random.uniform(kb1, (1, H_DIM), jnp.float32, -bound1, bound1)

    gamma = jnp.ones((1, H_DIM), jnp.float32)   # BatchNorm1d weight init
    beta = jnp.zeros((1, H_DIM), jnp.float32)   # BatchNorm1d bias init

    bound2 = 1.0 / (H_DIM ** 0.5)
    w2 = jax.random.uniform(kw2, (H_DIM, Z_DIM), jnp.float32, -bound2, bound2)
    b2 = jax.random.uniform(kb2, (1, Z_DIM), jnp.float32, -bound2, bound2)

    h_ref, z_ref = _reference(x, w1, b1, gamma, beta, w2, b2)

    # ---- f32 MXU-operand path: exact module semantics ----
    params_f32 = prepare_params(w1, b1, gamma, beta, w2, b2, matmul_dtype=jnp.float32)
    h_out, z_out = ladder_encoder_fwd(x, *params_f32, h_dim=H_DIM, z_dim=Z_DIM)
    jax.block_until_ready((h_out, z_out))
    assert h_out.shape == (N, H_DIM) and z_out.shape == (N, Z_DIM)
    assert jnp.allclose(h_out, h_ref, atol=1e-4, rtol=1e-4)
    assert jnp.allclose(z_out, z_ref, atol=1e-4, rtol=1e-4)

    # ---- bf16 MXU-operand path (v5e/v6e/v7x native MXU rate; f32 accumulation) ----
    params_bf16 = prepare_params(w1, b1, gamma, beta, w2, b2, matmul_dtype=jnp.bfloat16)
    h_bf, z_bf = ladder_encoder_fwd(x, *params_bf16, h_dim=H_DIM, z_dim=Z_DIM)
    jax.block_until_ready((h_bf, z_bf))
    assert h_bf.shape == (N, H_DIM) and z_bf.shape == (N, Z_DIM)
    assert jnp.allclose(h_bf, h_ref, atol=1e-1, rtol=1e-1)
    assert jnp.allclose(z_bf, z_ref, atol=1e-1, rtol=1e-1)

    print("KERNEL_OK")
</pallas_src>

<mosaic_0001>
module attributes {stable_mosaic.version = 11 : i64} {
  func.func @ladder_encoder_kernel(%arg0: memref<8x32xf32, #tpu.memory_space<vmem>>, %arg1: memref<32x128xf32, #tpu.memory_space<vmem>>, %arg2: memref<1x128xf32, #tpu.memory_space<vmem>>, %arg3: memref<1x128xf32, #tpu.memory_space<vmem>>, %arg4: memref<128x128xf32, #tpu.memory_space<vmem>>, %arg5: memref<1x128xf32, #tpu.memory_space<vmem>>, %arg6: memref<8x128xf32, #tpu.memory_space<vmem>>, %arg7: memref<8x128xf32, #tpu.memory_space<vmem>>) attributes {dimension_semantics = [], scalar_prefetch = 0 : i64, scratch_operands = 0 : i64, tpu.core_type = #tpu.core_type<tc>} {
    %c0 = arith.constant 0 : index
    %c0_0 = arith.constant 0 : index
    %0 = vector.load %arg0[%c0, %c0_0] : memref<8x32xf32, #tpu.memory_space<vmem>>, vector<8x32xf32>
    %c0_1 = arith.constant 0 : index
    %c0_2 = arith.constant 0 : index
    %1 = vector.load %arg1[%c0_1, %c0_2] : memref<32x128xf32, #tpu.memory_space<vmem>>, vector<32x128xf32>
    %cst = arith.constant dense<0.000000e+00> : vector<8x128xf32>
    %2 = tpu.matmul %0, %1, %cst {dimension_numbers = #tpu.dot_dimension_numbers<[1], [0], [0], [1], [0, 0, 1, 1], [], []>} : vector<8x32xf32>, vector<32x128xf32>, vector<8x128xf32> -> vector<8x128xf32>
    %cst_3 = arith.constant dense<0.000000e+00> : vector<128xf32>
    %3 = vector.multi_reduction <add>, %2, %cst_3 [0] : vector<8x128xf32> to vector<128xf32>
    %4 = vector.shape_cast %3 : vector<128xf32> to vector<1x128xf32>
    %cst_4 = arith.constant 1.250000e-01 : f32
    %5 = vector.broadcast %cst_4 : f32 to vector<1x128xf32>
    %6 = arith.mulf %4, %5 : vector<1x128xf32>
    %7 = vector.broadcast %6 : vector<1x128xf32> to vector<8x128xf32>
    %8 = arith.subf %2, %7 : vector<8x128xf32>
    %9 = arith.mulf %8, %8 : vector<8x128xf32>
    %cst_5 = arith.constant dense<0.000000e+00> : vector<128xf32>
    %10 = vector.multi_reduction <add>, %9, %cst_5 [0] : vector<8x128xf32> to vector<128xf32>
    %11 = vector.shape_cast %10 : vector<128xf32> to vector<1x128xf32>
    %cst_6 = arith.constant 1.250000e-01 : f32
    %12 = vector.broadcast %cst_6 : f32 to vector<1x128xf32>
    %13 = arith.mulf %11, %12 : vector<1x128xf32>
    %c0_7 = arith.constant 0 : index
    %c0_8 = arith.constant 0 : index
    %14 = vector.load %arg2[%c0_7, %c0_8] : memref<1x128xf32, #tpu.memory_space<vmem>>, vector<1x128xf32>
    %cst_9 = arith.constant 9.99999974E-6 : f32
    %15 = vector.broadcast %cst_9 : f32 to vector<1x128xf32>
    %16 = arith.addf %13, %15 : vector<1x128xf32>
    %17 = math.rsqrt %16 : vector<1x128xf32>
    %18 = arith.mulf %14, %17 : vector<1x128xf32>
    %19 = vector.broadcast %18 : vector<1x128xf32> to vector<8x128xf32>
    %20 = arith.mulf %8, %19 : vector<8x128xf32>
    %c0_10 = arith.constant 0 : index
    %c0_11 = arith.constant 0 : index
    %21 = vector.load %arg3[%c0_10, %c0_11] : memref<1x128xf32, #tpu.memory_space<vmem>>, vector<1x128xf32>
    %22 = vector.broadcast %21 : vector<1x128xf32> to vector<8x128xf32>
    %23 = arith.addf %20, %22 : vector<8x128xf32>
    %cst_12 = arith.constant 1.000000e-01 : f32
    %24 = vector.broadcast %cst_12 : f32 to vector<8x128xf32>
    %25 = arith.mulf %24, %23 : vector<8x128xf32>
    %26 = arith.maximumf %23, %25 : vector<8x128xf32>
    %c0_13 = arith.constant 0 : index
    %c0_14 = arith.constant 0 : index
    %27 = vector.load %arg6[%c0_13, %c0_14] : memref<8x128xf32, #tpu.memory_space<vmem>>, vector<8x128xf32>
    tpu.vector_store %arg6[%c0_13, %c0_14], %26 {strides = array<i32>} : memref<8x128xf32, #tpu.memory_space<vmem>>, vector<8x128xf32>,
    %c0_15 = arith.constant 0 : index
    %c0_16 = arith.constant 0 : index
    %28 = vector.load %arg4[%c0_15, %c0_16] : memref<128x128xf32, #tpu.memory_space<vmem>>, vector<128x128xf32>
    %cst_17 = arith.constant dense<0.000000e+00> : vector<8x128xf32>
    %29 = tpu.matmul %26, %28, %cst_17 {dimension_numbers = #tpu.dot_dimension_numbers<[1], [0], [0], [1], [0, 0, 1, 1], [], []>} : vector<8x128xf32>, vector<128x128xf32>, vector<8x128xf32> -> vector<8x128xf32>
    %c0_18 = arith.constant 0 : index
    %c0_19 = arith.constant 0 : index
    %30 = vector.load %arg5[%c0_18, %c0_19] : memref<1x128xf32, #tpu.memory_space<vmem>>, vector<1x128xf32>
    %31 = vector.broadcast %30 : vector<1x128xf32> to vector<8x128xf32>
    %32 = arith.addf %29, %31 : vector<8x128xf32>
    %c0_20 = arith.constant 0 : index
    %c0_21 = arith.constant 0 : index
    %33 = vector.load %arg7[%c0_20, %c0_21] : memref<8x128xf32, #tpu.memory_space<vmem>>, vector<8x128xf32>
    tpu.vector_store %arg7[%c0_20, %c0_21], %32 {strides = array<i32>} : memref<8x128xf32, #tpu.memory_space<vmem>>, vector<8x128xf32>,
    return
  }
}

</mosaic_0001>

<llo_original>
// kernel: ladder_encoder_fwd.1
$region0: #{ladder_encoder_fwd.1}
  #allocation0 [shape = 'u32[]', space=smem, size = 0x4, offset = 0x4, fixed_abs, tag = 'smem constant byte address 0x4 - core index']
  #allocation1 [shape = 'u32[144,128]{1,0:T(1,128)}', space=vmem, size = 0x12000, scoped, tag = 'internal scratch']
  %s0 = inlined_call_operand.hbm [shape: f32[8,32], index: 0, kind: input, shape index: {}]
  %s1 = inlined_call_operand.hbm [shape: f32[32,128], index: 1, kind: input, shape index: {}]
  %s2 = inlined_call_operand.hbm [shape: f32[1,128], index: 2, kind: input, shape index: {}]
  %s3 = inlined_call_operand.hbm [shape: f32[1,128], index: 3, kind: input, shape index: {}]
  %s4 = inlined_call_operand.hbm [shape: f32[128,128], index: 4, kind: input, shape index: {}]
  %s5 = inlined_call_operand.hbm [shape: f32[1,128], index: 5, kind: input, shape index: {}]
  %s6 = inlined_call_operand.hbm [shape: f32[8,128], index: 6, kind: output, shape index: {0}]
  %s7 = inlined_call_operand.hbm [shape: f32[8,128], index: 7, kind: output, shape index: {1}]
  %8 = xla_tuple %s6, %s7
  %s9 = sld [smem:[#allocation0]]
  $region66: #{ladder_encoder_fwd.1} parent=0
    _
  %s11 = ssub.s32 1, %s9
  %s12 = scalar_select 0, %s11, %s9
  $region1: #{ladder_encoder_fwd.1} parent=0
    #allocation2 [shape = 'u8[4096]{0}', space=vmem, size = 0x1000, scoped, tag = 'input window, operand 0, single buffered']
    #allocation3 [shape = 's32[1]{0}', space=sflag, size = 0x4, scoped, tag = 'scoped memory for ladder_encoder_fwd.1']
    #allocation4 [shape = 's32[1]{0}', space=sflag, size = 0x4, scoped, tag = 'scoped memory for ladder_encoder_fwd.1']
    #allocation5 [shape = 'u8[16384]{0}', space=vmem, size = 0x4000, scoped, tag = 'input window, operand 1, single buffered']
    #allocation6 [shape = 's32[1]{0}', space=sflag, size = 0x4, scoped, tag = 'scoped memory for ladder_encoder_fwd.1']
    #allocation7 [shape = 'u8[512]{0}', space=vmem, size = 0x400, scoped, tag = 'input window, operand 2, single buffered']
    #allocation8 [shape = 'u8[512]{0}', space=vmem, size = 0x400, scoped, tag = 'input window, operand 3, single buffered']
    #allocation9 [shape = 's32[1]{0}', space=sflag, size = 0x4, scoped, tag = 'scoped memory for ladder_encoder_fwd.1']
    #allocation10 [shape = 'u8[65536]{0}', space=vmem, size = 0x10000, scoped, tag = 'input window, operand 4, single buffered']
    #allocation11 [shape = 'u8[512]{0}', space=vmem, size = 0x400, scoped, tag = 'input window, operand 5, single buffered']
    #allocation12 [shape = 's32[1]{0}', space=sflag, size = 0x4, scoped, tag = 'scoped memory for ladder_encoder_fwd.1']
    #allocation13 [shape = 'u8[4096]{0}', space=vmem, size = 0x1000, scoped, tag = 'output window, operand 0, single buffered']
    #allocation14 [shape = 'u8[4096]{0}', space=vmem, size = 0x1000, scoped, tag = 'output window, operand 1, single buffered']
    #allocation15 [shape = 's32[1]{0}', space=sflag, size = 0x4, scoped, tag = 'scoped memory for ladder_encoder_fwd.1']
    %13 = vsyncpa [#allocation3], 0
    %14 = vsyncpa [#allocation6], 0
    %15 = vsyncpa [#allocation9], 0
    %16 = vsyncpa [#allocation12], 0
    %17 = vsyncpa [#allocation4], 0
    %18 = vsyncpa [#allocation15], 0
    // Predicated region
    $region2: #{ladder_encoder_fwd.1} parent=1 // pred_check
      _
    $region3: #{ladder_encoder_fwd.1} parent=1 // pred_check_branch
      %20 = sbr.rel (0) target = $region5
    $region4: #{ladder_encoder_fwd.1} parent=1 // pred_region
      %s22 = ssub.s32 128, 128
      %23 = vsyncadd [#allocation3], %s22
      %s25 = sshll.u32 [#allocation2], 4
      %s26 = int_to_ptr.vmem [resolvable:$true] %s25
      %28 = dma.hbm_to_vmem [thread:$0]  %s0, 128, %s26, [#allocation3]
    $region5: #{ladder_encoder_fwd.1} parent=1 // pred_fallthru
      _
    // Predicated region
    $region6: #{ladder_encoder_fwd.1} parent=1 // pred_check
      _
    $region7: #{ladder_encoder_fwd.1} parent=1 // pred_check_branch
      %30 = sbr.rel (0) target = $region9
    $region8: #{ladder_encoder_fwd.1} parent=1 // pred_region
      %s32 = ssub.s32 512, 512
      %33 = vsyncadd [#allocation6], %s32
      %s34 = sshll.u32 [#allocation5], 4
      %s35 = int_to_ptr.vmem [resolvable:$true] %s34
      %40 = dma.hbm_to_vmem [thread:$0]  %s1, 512, %s35, [#allocation6], 128, 128, 8
    $region9: #{ladder_encoder_fwd.1} parent=1 // pred_fallthru
      _
    // Predicated region
    $region10: #{ladder_encoder_fwd.1} parent=1 // pred_check
      _
    $region11: #{ladder_encoder_fwd.1} parent=1 // pred_check_branch
      %42 = sbr.rel (0) target = $region13
    $region12: #{ladder_encoder_fwd.1} parent=1 // pred_region
      %s44 = ssub.s32 16, 16
      %45 = vsyncadd [#allocation6], %s44
      %s47 = sshll.u32 [#allocation7], 4
      %s48 = int_to_ptr.vmem [resolvable:$true] %s47
      %50 = dma.hbm_to_vmem [thread:$0]  %s2, 16, %s48, [#allocation6]
    $region13: #{ladder_encoder_fwd.1} parent=1 // pred_fallthru
      _
    // Predicated region
    $region14: #{ladder_encoder_fwd.1} parent=1 // pred_check
      _
    $region15: #{ladder_encoder_fwd.1} parent=1 // pred_check_branch
      %52 = sbr.rel (0) target = $region17
    $region16: #{ladder_encoder_fwd.1} parent=1 // pred_region
      %s54 = ssub.s32 16, 16
      %55 = vsyncadd [#allocation9], %s54
      %s57 = sshll.u32 [#allocation8], 4
      %s58 = int_to_ptr.vmem [resolvable:$true] %s57
      %60 = dma.hbm_to_vmem [thread:$0]  %s3, 16, %s58, [#allocation9]
    $region17: #{ladder_encoder_fwd.1} parent=1 // pred_fallthru
      _
    // Predicated region
    $region18: #{ladder_encoder_fwd.1} parent=1 // pred_check
      _
    $region19: #{ladder_encoder_fwd.1} parent=1 // pred_check_branch
      %62 = sbr.rel (0) target = $region21
    $region20: #{ladder_encoder_fwd.1} parent=1 // pred_region
      %s64 = ssub.s32 2048, 2048
      %65 = vsyncadd [#allocation9], %s64
      %s66 = sshll.u32 [#allocation10], 4
      %s67 = int_to_ptr.vmem [resolvable:$true] %s66
      %72 = dma.hbm_to_vmem [thread:$0]  %s4, 2048, %s67, [#allocation9], 128, 128, 8
    $region21: #{ladder_encoder_fwd.1} parent=1 // pred_fallthru
      _
    // Predicated region
    $region22: #{ladder_encoder_fwd.1} parent=1 // pred_check
      _
    $region23: #{ladder_encoder_fwd.1} parent=1 // pred_check_branch
      %74 = sbr.rel (0) target = $region25
    $region24: #{ladder_encoder_fwd.1} parent=1 // pred_region
      %s76 = ssub.s32 16, 16
      %77 = vsyncadd [#allocation12], %s76
      %s79 = sshll.u32 [#allocation11], 4
      %s80 = int_to_ptr.vmem [resolvable:$true] %s79
      %82 = dma.hbm_to_vmem [thread:$0]  %s5, 16, %s80, [#allocation12]
    $region25: #{ladder_encoder_fwd.1} parent=1 // pred_fallthru
      _
    // Predicated region
    $region26: #{ladder_encoder_fwd.1} parent=1 // pred_check
      _
    $region27: #{ladder_encoder_fwd.1} parent=1 // pred_check_branch
      %84 = sbr.rel (0) target = $region29
    $region28: #{ladder_encoder_fwd.1} parent=1 // pred_region
      %85 = dma.done [#allocation3], 128
    $region29: #{ladder_encoder_fwd.1} parent=1 // pred_fallthru
      _
    // Predicated region
    $region30: #{ladder_encoder_fwd.1} parent=1 // pred_check
      _
    $region31: #{ladder_encoder_fwd.1} parent=1 // pred_check_branch
      %87 = sbr.rel (0) target = $region33
    $region32: #{ladder_encoder_fwd.1} parent=1 // pred_region
      %88 = dma.done [#allocation6], 512
    $region33: #{ladder_encoder_fwd.1} parent=1 // pred_fallthru
      _
    // Predicated region
    $region34: #{ladder_encoder_fwd.1} parent=1 // pred_check
      _
    $region35: #{ladder_encoder_fwd.1} parent=1 // pred_check_branch
      %90 = sbr.rel (0) target = $region37
    $region36: #{ladder_encoder_fwd.1} parent=1 // pred_region
      %91 = dma.done [#allocation6], 16
    $region37: #{ladder_encoder_fwd.1} parent=1 // pred_fallthru
      _
    // Predicated region
    $region38: #{ladder_encoder_fwd.1} parent=1 // pred_check
      _
    $region39: #{ladder_encoder_fwd.1} parent=1 // pred_check_branch
      %93 = sbr.rel (0) target = $region41
    $region40: #{ladder_encoder_fwd.1} parent=1 // pred_region
      %94 = dma.done [#allocation9], 16
    $region41: #{ladder_encoder_fwd.1} parent=1 // pred_fallthru
      _
    // Predicated region
    $region42: #{ladder_encoder_fwd.1} parent=1 // pred_check
      _
    $region43: #{ladder_encoder_fwd.1} parent=1 // pred_check_branch
      %96 = sbr.rel (0) target = $region45
    $region44: #{ladder_encoder_fwd.1} parent=1 // pred_region
      %97 = dma.done [#allocation9], 2048
    $region45: #{ladder_encoder_fwd.1} parent=1 // pred_fallthru
      _
    // Predicated region
    $region46: #{ladder_encoder_fwd.1} parent=1 // pred_check
      _
    $region47: #{ladder_encoder_fwd.1} parent=1 // pred_check_branch
      %99 = sbr.rel (0) target = $region49
    $region48: #{ladder_encoder_fwd.1} parent=1 // pred_region
      %100 = dma.done [#allocation12], 16
    $region49: #{ladder_encoder_fwd.1} parent=1 // pred_fallthru
      _
    %v101 = vld [vmem:[#allocation2] sm:$0xff]
    %v102 = vld [vmem:[#allocation5] sm:$0xff]
    %v103 = vld [vmem:[#allocation5 + $0x8] sm:$0xff]
    %v104 = vld [vmem:[#allocation5 + $0x10] sm:$0xff]
    %v105 = vld [vmem:[#allocation5 + $0x18] sm:$0xff]
    %vm106 = vcmask 261120
    %v108 = vsel %vm106, %v101, 0
    %110 = vmatprep.subr.mxu0 0.0
    %111 = vmatpush1.msra.mxu0 %v102
    %112 = vmatprep.subr.mxu0 0.0
    %113 = vmatpush1.msra.mxu0 %v103
    %114 = vmatprep.subr.mxu0 0.0
    %115 = vmatpush1.msra.mxu0 %v104
    %116 = vmatprep.subr.mxu0 0.0
    %117 = vmatpush1.msra.mxu0 %v105
    %118 = vmatprep.subr.mxu0 0.0
    %119 = vmatpush1.msra.mxu0 0.0
    %120 = vmatprep.subr.mxu0 0.0
    %121 = vmatpush1.msra.mxu0 0.0
    %122 = vmatprep.subr.mxu0 0.0
    %123 = vmatpush1.msra.mxu0 0.0
    %124 = vmatprep.subr.mxu0 0.0
    %125 = vmatpush1.msra.mxu0 0.0
    %126 = vmatprep.subr.mxu0 0.0
    %127 = vmatpush1.msra.mxu0 0.0
    %128 = vmatprep.subr.mxu0 0.0
    %129 = vmatpush1.msra.mxu0 0.0
    %130 = vmatprep.subr.mxu0 0.0
    %131 = vmatpush1.msra.mxu0 0.0
    %132 = vmatprep.subr.mxu0 0.0
    %133 = vmatpush1.msra.mxu0 0.0
    %134 = vmatprep.subr.mxu0 0.0
    %135 = vmatpush1.msra.mxu0 0.0
    %136 = vmatprep.subr.mxu0 0.0
    %137 = vmatpush1.msra.mxu0 0.0
    %138 = vmatprep.subr.mxu0 0.0
    %139 = vmatpush1.msra.mxu0 0.0
    %140 = vmatprep.subr.mxu0 0.0
    %141 = vmatpush1.msra.mxu0 0.0
    %142 = vmatprep.subr.mxu0 0.0
    %143 = vmatpush1.msra.mxu0 0.0
    %144 = vmatprep.subr.mxu0 0.0
    %145 = vmatpush1.msra.mxu0 0.0
    %146 = vmatprep.subr.mxu0 0.0
    %147 = vmatpush1.msra.mxu0 0.0
    %148 = vmatprep.subr.mxu0 0.0
    %149 = vmatpush1.msra.mxu0 0.0
    %150 = vmatprep.subr.mxu0 0.0
    %151 = vmatpush1.msra.mxu0 0.0
    %152 = vmatprep.subr.mxu0 0.0
    %153 = vmatpush1.msra.mxu0 0.0
    %154 = vmatprep.subr.mxu0 0.0
    %155 = vmatpush1.msra.mxu0 0.0
    %156 = vmatprep.subr.mxu0 0.0
    %157 = vmatpush1.msra.mxu0 0.0
    %158 = vmatprep.subr.mxu0 0.0
    %159 = vmatpush1.msra.mxu0 0.0
    %160 = vmatprep.subr.mxu0 0.0
    %161 = vmatpush1.msra.mxu0 0.0
    %162 = vmatprep.subr.mxu0 0.0
    %163 = vmatpush1.msra.mxu0 0.0
    %164 = vmatprep.subr.mxu0 0.0
    %165 = vmatpush1.msra.mxu0 0.0
    %166 = vmatprep.subr.mxu0 0.0
    %167 = vmatpush1.msra.mxu0 0.0
    %168 = vmatprep.subr.mxu0 0.0
    %169 = vmatpush1.msra.mxu0 0.0
    %170 = vmatprep.subr.mxu0 0.0
    %171 = vmatpush1.msra.mxu0 0.0
    %172 = vmatprep.subr.mxu0 0.0
    %173 = vmatpush1.msra.mxu0 0.0
    %174 = vmatprep.mubr.f32.mxu0 0.0
    %175 = vmatmul.mubr.f32.gmra.mrb[0].mxu0 %v108
    %v176 = vpop.f32.mrb[0].mxu0
    %v177 = vadd.f32 0.0, %v176
    %v178 = vpop.f32.mrb[0].mxu0
    %179 = vdwg.mxu0
    %v180 = vrot.slane %v177, 4
    %v181 = vadd.f32 %v177, %v180
    %v182 = vrot.slane %v181, 2
    %v183 = vadd.f32 %v181, %v182
    %v184 = vrot.slane %v183, 1
    %v185 = vadd.f32 %v183, %v184
    %v186 = vmul.f32 %v185, 0.125
    %v187 = vsub.f32 %v177, %v186
    %v188 = vmul.f32 %v187, %v187
    %v189 = vrot.slane %v188, 4
    %v190 = vadd.f32 %v188, %v189
    %v191 = vrot.slane %v190, 2
    %v192 = vadd.f32 %v190, %v191
    %v193 = vrot.slane %v192, 1
    %v194 = vadd.f32 %v192, %v193
    %v195 = vmul.f32 %v194, 0.125
    %v196 = vld [vmem:[#allocation7] sm:$0x1]
    %v197 = vadd.f32 %v195, 1e-05
    %v198 = vrsqrt.pop %v197
    %v199 = vmul.f32 %v196, %v198
    %v201 = vlaneseq
    %v202 = vshrl.u32 %v201, 7
    %v203 = vsub.s32 0, %v202
    %v204 = vrot.slane %v199, %v203
    %v206 = vmul.f32 %v187, %v204
    %v207 = vld [vmem:[#allocation8] sm:$0x1]
    %v209 = vlaneseq
    %v210 = vshrl.u32 %v209, 7
    %v211 = vsub.s32 0, %v210
    %v212 = vrot.slane %v207, %v211
    %v214 = vadd.f32 %v206, %v212
    %v215 = vmul.f32 %v214, 0.1
    %v216 = vmax.f32 %v214, %v215
    %217 = vst [vmem:[#allocation13] sm:$0xff] %v216
    %v218 = vld [vmem:[#allocation10] sm:$0xff]
    %v219 = vld [vmem:[#allocation10 + $0x8] sm:$0xff]
    %v220 = vld [vmem:[#allocation10 + $0x10] sm:$0xff]
    %v221 = vld [vmem:[#allocation10 + $0x18] sm:$0xff]
    %v222 = vld [vmem:[#allocation10 + $0x20] sm:$0xff]
    %v223 = vld [vmem:[#allocation10 + $0x28] sm:$0xff]
    %v224 = vld [vmem:[#allocation10 + $0x30] sm:$0xff]
    %v225 = vld [vmem:[#allocation10 + $0x38] sm:$0xff]
    %v226 = vld [vmem:[#allocation10 + $0x40] sm:$0xff]
    %v227 = vld [vmem:[#allocation10 + $0x48] sm:$0xff]
    %v228 = vld [vmem:[#allocation10 + $0x50] sm:$0xff]
    %v229 = vld [vmem:[#allocation10 + $0x58] sm:$0xff]
    %v230 = vld [vmem:[#allocation10 + $0x60] sm:$0xff]
    %v231 = vld [vmem:[#allocation10 + $0x68] sm:$0xff]
    %v232 = vld [vmem:[#allocation10 + $0x70] sm:$0xff]
    %v233 = vld [vmem:[#allocation10 + $0x78] sm:$0xff]
    %v234 = vld [vmem:[#allocation11] sm:$0x1]
    %v236 = vlaneseq
    %v237 = vshrl.u32 %v236, 7
    %v238 = vsub.s32 0, %v237
    %v239 = vrot.slane %v234, %v238
    %241 = vmatprep.subr.mxu0 0.0
    %242 = vmatpush1.msra.mxu0 %v218
    %243 = vmatprep.subr.mxu0 0.0
    %244 = vmatpush1.msra.mxu0 %v219
    %245 = vmatprep.subr.mxu0 0.0
    %246 = vmatpush1.msra.mxu0 %v220
    %247 = vmatprep.subr.mxu0 0.0
    %248 = vmatpush1.msra.mxu0 %v221
    %249 = vmatprep.subr.mxu0 0.0
    %250 = vmatpush1.msra.mxu0 %v222
    %251 = vmatprep.subr.mxu0 0.0
    %252 = vmatpush1.msra.mxu0 %v223
    %253 = vmatprep.subr.mxu0 0.0
    %254 = vmatpush1.msra.mxu0 %v224
    %255 = vmatprep.subr.mxu0 0.0
    %256 = vmatpush1.msra.mxu0 %v225
    %257 = vmatprep.subr.mxu0 0.0
    %258 = vmatpush1.msra.mxu0 %v226
    %259 = vmatprep.subr.mxu0 0.0
    %260 = vmatpush1.msra.mxu0 %v227
    %261 = vmatprep.subr.mxu0 0.0
    %262 = vmatpush1.msra.mxu0 %v228
    %263 = vmatprep.subr.mxu0 0.0
    %264 = vmatpush1.msra.mxu0 %v229
    %265 = vmatprep.subr.mxu0 0.0
    %266 = vmatpush1.msra.mxu0 %v230
    %267 = vmatprep.subr.mxu0 0.0
    %268 = vmatpush1.msra.mxu0 %v231
    %269 = vmatprep.subr.mxu0 0.0
    %270 = vmatpush1.msra.mxu0 %v232
    %271 = vmatprep.subr.mxu0 0.0
    %272 = vmatpush1.msra.mxu0 %v233
    %273 = vmatprep.subr.mxu0 0.0
    %274 = vmatpush1.msra.mxu0 0.0
    %275 = vmatprep.subr.mxu0 0.0
    %276 = vmatpush1.msra.mxu0 0.0
    %277 = vmatprep.subr.mxu0 0.0
    %278 = vmatpush1.msra.mxu0 0.0
    %279 = vmatprep.subr.mxu0 0.0
    %280 = vmatpush1.msra.mxu0 0.0
    %281 = vmatprep.subr.mxu0 0.0
    %282 = vmatpush1.msra.mxu0 0.0
    %283 = vmatprep.subr.mxu0 0.0
    %284 = vmatpush1.msra.mxu0 0.0
    %285 = vmatprep.subr.mxu0 0.0
    %286 = vmatpush1.msra.mxu0 0.0
    %287 = vmatprep.subr.mxu0 0.0
    %288 = vmatpush1.msra.mxu0 0.0
    %289 = vmatprep.subr.mxu0 0.0
    %290 = vmatpush1.msra.mxu0 0.0
    %291 = vmatprep.subr.mxu0 0.0
    %292 = vmatpush1.msra.mxu0 0.0
    %293 = vmatprep.subr.mxu0 0.0
    %294 = vmatpush1.msra.mxu0 0.0
    %295 = vmatprep.subr.mxu0 0.0
    %296 = vmatpush1.msra.mxu0 0.0
    %297 = vmatprep.subr.mxu0 0.0
    %298 = vmatpush1.msra.mxu0 0.0
    %299 = vmatprep.subr.mxu0 0.0
    %300 = vmatpush1.msra.mxu0 0.0
    %301 = vmatprep.subr.mxu0 0.0
    %302 = vmatpush1.msra.mxu0 0.0
    %303 = vmatprep.subr.mxu0 0.0
    %304 = vmatpush1.msra.mxu0 0.0
    %305 = vmatprep.mubr.f32.mxu0 0.0
    %306 = vmatmul.mubr.f32.gmra.mrb[0].mxu0 %v216
    %v307 = vpop.f32.mrb[0].mxu0
    %v308 = vadd.f32 %v239, %v307
    %v309 = vpop.f32.mrb[0].mxu0
    %310 = vdwg.mxu0
    %311 = vst [vmem:[#allocation14] sm:$0xff] %v308
    // Predicated region
    $region50: #{ladder_encoder_fwd.1} parent=1 // pred_check
      _
    $region51: #{ladder_encoder_fwd.1} parent=1 // pred_check_branch
      %313 = sbr.rel (0) target = $region53
    $region52: #{ladder_encoder_fwd.1} parent=1 // pred_region
      %s315 = ssub.s32 128, 128
      %316 = vsyncadd [#allocation4], %s315
      %s318 = sshll.u32 [#allocation13], 4
      %s319 = int_to_ptr.vmem [resolvable:$true] %s318
      %321 = dma.vmem_to_hbm [thread:$0]  %s319, 128, %s6, [#allocation4]
    $region53: #{ladder_encoder_fwd.1} parent=1 // pred_fallthru
      _
    // Predicated region
    $region54: #{ladder_encoder_fwd.1} parent=1 // pred_check
      _
    $region55: #{ladder_encoder_fwd.1} parent=1 // pred_check_branch
      %323 = sbr.rel (0) target = $region57
    $region56: #{ladder_encoder_fwd.1} parent=1 // pred_region
      %s325 = ssub.s32 128, 128
      %326 = vsyncadd [#allocation15], %s325
      %s328 = sshll.u32 [#allocation14], 4
      %s329 = int_to_ptr.vmem [resolvable:$true] %s328
      %331 = dma.vmem_to_hbm [thread:$0]  %s329, 128, %s7, [#allocation15]
    $region57: #{ladder_encoder_fwd.1} parent=1 // pred_fallthru
      _
    // Predicated region
    $region58: #{ladder_encoder_fwd.1} parent=1 // pred_check
      _
    $region59: #{ladder_encoder_fwd.1} parent=1 // pred_check_branch
      %333 = sbr.rel (0) target = $region61
    $region60: #{ladder_encoder_fwd.1} parent=1 // pred_region
      %334 = dma.done [#allocation4], 128
    $region61: #{ladder_encoder_fwd.1} parent=1 // pred_fallthru
      _
    // Predicated region
    $region62: #{ladder_encoder_fwd.1} parent=1 // pred_check
      _
    $region63: #{ladder_encoder_fwd.1} parent=1 // pred_check_branch
      %336 = sbr.rel (0) target = $region65
    $region64: #{ladder_encoder_fwd.1} parent=1 // pred_region
      %337 = dma.done [#allocation15], 128
    $region65: #{ladder_encoder_fwd.1} parent=1 // pred_fallthru
      _
    %338 = vsyncpa [#allocation3], 1
    %339 = vsyncpa [#allocation6], 1
    %340 = vsyncpa [#allocation9], 1
    %341 = vsyncpa [#allocation12], 1
    %342 = vsyncpa [#allocation4], 1
    %343 = vsyncpa [#allocation15], 1

</llo_original>
